<compile_context>
chip_gen: v5e
topology: v5e:2x2
jax: 0.10.0
libtpu: 0.0.40
codegen_flags: <defaults>
</compile_context>

<pallas_src>
import jax
import jax.numpy as jnp
from jax.experimental import pallas as pl
from jax.experimental.pallas import tpu as pltpu

HIDDEN = 100
LANE = 128
SUBLANE_BF16 = 16  # bf16 sublane-packing granularity for the batch (row) axis


def _round_up(n, m):
    return (n + m - 1) // m * m


def _mlp_kernel(x_ref, w1_ref, b1_ref, w2_ref, b2_ref, w3_ref, b3_ref, o_ref):
    # Fused 3-layer MLP on one (TB, *) batch tile. Matmuls run on the MXU in
    # the weights' dtype (bf16 by default) with f32 accumulation; bias add +
    # ReLU on the VPU in f32.  x is cast in-kernel; the first dot uses
    # K = in_dim directly (no feature-dim padding of x anywhere).
    x = x_ref[...].astype(w1_ref.dtype)

    h1 = jnp.dot(x, w1_ref[...], preferred_element_type=jnp.float32) + b1_ref[...]
    h1 = jnp.maximum(h1, 0.0).astype(w2_ref.dtype)

    h2 = jnp.dot(h1, w2_ref[...], preferred_element_type=jnp.float32) + b2_ref[...]
    h2 = jnp.maximum(h2, 0.0).astype(w3_ref.dtype)

    y = jnp.dot(h2, w3_ref[...], preferred_element_type=jnp.float32) + b3_ref[...]
    o_ref[...] = y.astype(o_ref.dtype)


def prepare_params(params, compute_dtype=jnp.bfloat16):
    """Pad + cast the weights ONCE (hoisted out of the per-step forward).

    Weights are stored (in_features, out_features) == W^T of the PyTorch
    layout.  The hidden/output (lane) dims are zero-padded to multiples of 128
    so every MXU operand and the output store are lane-dense; layer 1's K dim
    stays at in_dim so x needs no feature-dim padding.  Zero padding is exact
    (zero K rows contribute nothing; ReLU(0)=0); biases stay f32 (added after
    the f32 accumulation).
    """
    w1, b1 = params["w1"], params["b1"]
    w2, b2 = params["w2"], params["b2"]
    w3, b3 = params["w3"], params["b3"]

    in_dim, hid = w1.shape
    out_dim = w3.shape[1]
    hid_pad = _round_up(max(hid, LANE), LANE)
    out_pad = _round_up(max(out_dim, LANE), LANE)

    return dict(
        w1=jnp.pad(w1, ((0, 0), (0, hid_pad - hid))).astype(compute_dtype),
        w2=jnp.pad(w2, ((0, hid_pad - hid), (0, hid_pad - hid))).astype(compute_dtype),
        w3=jnp.pad(w3, ((0, hid_pad - hid), (0, out_pad - out_dim))).astype(compute_dtype),
        b1=jnp.pad(b1, ((0, 0), (0, hid_pad - hid))).astype(jnp.float32),
        b2=jnp.pad(b2, ((0, 0), (0, hid_pad - hid))).astype(jnp.float32),
        b3=jnp.pad(b3, ((0, 0), (0, out_pad - out_dim))).astype(jnp.float32),
        in_dim=in_dim, hid=hid, out_dim=out_dim,
        hid_pad=hid_pad, out_pad=out_pad,
    )


def network_forward(x, prepared, *, block_batch=2048, out_dtype=jnp.float32,
                    return_padded=False):
    """Fused 3-layer MLP forward.

    x: (batch, input_dim) float32.
    prepared: output of prepare_params() (padded / pre-cast weights, reused
              across calls).
    out_dtype: set jnp.bfloat16 to halve output writeback if the consumer
               tolerates it (default f32 matches the PyTorch module).
    return_padded: return the lane-dense (batch_pad, 128) slab and let the
                   consumer (argmax / Q-gather) fuse the row/column selection
                   instead of doing a standalone slice pass here.
    """
    in_dim = prepared["in_dim"]
    out_dim = prepared["out_dim"]
    hid_pad = prepared["hid_pad"]
    out_pad = prepared["out_pad"]
    w1p, b1p = prepared["w1"], prepared["b1"]
    w2p, b2p = prepared["w2"], prepared["b2"]
    w3p, b3p = prepared["w3"], prepared["b3"]

    batch = x.shape[0]
    assert x.shape[1] == in_dim

    # Batch tiling: round to 16 rows (bf16 sublane packing); aim for >= 2 grid
    # steps so v7x's 2 TensorCores both get work on the "parallel" axis.  VMEM
    # is never the limit at these sizes -- block_batch only bounds per-step
    # latency (default 2048; sweep 1024-4096 if tuning).
    bb = max(SUBLANE_BF16, (block_batch // SUBLANE_BF16) * SUBLANE_BF16)
    batch_r = _round_up(batch, SUBLANE_BF16)
    if batch_r <= SUBLANE_BF16:
        tb = SUBLANE_BF16
    else:
        tb = min(bb, _round_up(pl.cdiv(batch_r, 2), SUBLANE_BF16))
    batch_pad = _round_up(batch_r, tb)

    xp = x if batch_pad == batch else jnp.pad(x, ((0, batch_pad - batch), (0, 0)))

    grid = (batch_pad // tb,)

    # x/out: batch-tiled, lane-dense last dims (in_dim equals the full array
    # dim; out_pad is a multiple of 128 -> unmasked stores).
    x_spec = pl.BlockSpec((tb, in_dim), lambda i: (i, 0))
    o_spec = pl.BlockSpec((tb, out_pad), lambda i: (i, 0))
    # Weights/biases: full block, constant index_map -> VMEM-resident across
    # grid steps (no re-DMA per step).
    const = lambda a: pl.BlockSpec(a.shape, lambda i, _nd=a.ndim: (0,) * _nd)

    out_itemsize = int(jnp.dtype(out_dtype).itemsize)
    weight_bytes = sum(int(a.size) * int(a.dtype.itemsize)
                       for a in (w1p, b1p, w2p, b2p, w3p, b3p))

    flops = 2 * batch_pad * (in_dim * hid_pad + hid_pad * hid_pad + hid_pad * out_pad)
    bytes_accessed = (weight_bytes
                      + batch_pad * in_dim * int(x.dtype.itemsize)
                      + batch_pad * out_pad * out_itemsize)
    cost = pl.CostEstimate(flops=flops, transcendentals=0,
                           bytes_accessed=bytes_accessed)

    # VMEM budget: double-buffered x/out tiles + resident weights + in-kernel
    # intermediates, with 2x headroom.  Floor 32 MiB (v5e default scoped limit
    # is only 16 MiB), ceiling 48 MiB (below v7x's 64 MiB physical).
    cdt_size = int(jnp.dtype(w1p.dtype).itemsize)
    per_step = (2 * tb * in_dim * int(x.dtype.itemsize)
                + 2 * tb * out_pad * out_itemsize
                + weight_bytes
                + 3 * tb * hid_pad * 4          # f32 accumulators (h1, h2, y)
                + 2 * tb * hid_pad * cdt_size)  # bf16 re-casts of h1, h2
    vmem_limit = int(min(max(2 * per_step, 32 * 1024 * 1024), 48 * 1024 * 1024))

    out_padded = pl.pallas_call(
        _mlp_kernel,
        out_shape=jax.ShapeDtypeStruct((batch_pad, out_pad), out_dtype),
        grid=grid,
        in_specs=[x_spec, const(w1p), const(b1p), const(w2p), const(b2p),
                  const(w3p), const(b3p)],
        out_specs=o_spec,
        compiler_params=pltpu.CompilerParams(
            dimension_semantics=("parallel",),
            vmem_limit_bytes=vmem_limit),
        cost_estimate=cost,
    )(xp, w1p, b1p, w2p, b2p, w3p, b3p)

    if return_padded:
        return out_padded
    # Column/row selection to the logical (batch, out_dim) shape; prefer
    # return_padded=True and fusing this into the consumer on hot paths.
    return out_padded[:batch, :out_dim]


def init_params(key, input_dim, output_dim):
    """Deterministic init mimicking PyTorch nn.Linear default (U[-1/sqrt(fan_in), +])."""
    def linear(k, fan_in, fan_out):
        kw, kb = jax.random.split(k)
        bound = 1.0 / jnp.sqrt(jnp.float32(fan_in))
        # stored as (in_features, out_features) == W^T of the PyTorch layout
        w = jax.random.uniform(kw, (fan_in, fan_out), jnp.float32, -bound, bound)
        b = jax.random.uniform(kb, (1, fan_out), jnp.float32, -bound, bound)
        return w, b

    k1, k2, k3 = jax.random.split(key, 3)
    w1, b1 = linear(k1, input_dim, HIDDEN)
    w2, b2 = linear(k2, HIDDEN, HIDDEN)
    w3, b3 = linear(k3, HIDDEN, output_dim)
    return dict(w1=w1, b1=b1, w2=w2, b2=b2, w3=w3, b3=b3)


def reference_forward(x, p, compute_dtype=jnp.bfloat16):
    # Mirrors the kernel arithmetic: operands in compute_dtype, f32 accumulate.
    prec = (jax.lax.Precision.HIGHEST
            if jnp.dtype(compute_dtype) == jnp.dtype(jnp.float32) else None)

    def dense(a, w, b):
        return jnp.dot(a.astype(compute_dtype), w.astype(compute_dtype),
                       preferred_element_type=jnp.float32, precision=prec) + b

    h1 = jnp.maximum(dense(x, p["w1"], p["b1"]), 0.0)
    h2 = jnp.maximum(dense(h1, p["w2"], p["b2"]), 0.0)
    return dense(h2, p["w3"], p["b3"])


if __name__ == "__main__":
    key = jax.random.PRNGKey(0)
    k_params, k_x, k_x2 = jax.random.split(key, 3)

    batch, input_dim, output_dim = 8, 16, 4
    params = init_params(k_params, input_dim, output_dim)

    # Prepare (pad + cast) the weights ONCE; reuse across all forward calls.
    prep_bf16 = prepare_params(params, compute_dtype=jnp.bfloat16)
    prep_f32 = prepare_params(params, compute_dtype=jnp.float32)

    # 1) Small batch, bf16 compute path (default fast path).
    x = jax.random.normal(k_x, (batch, input_dim), jnp.float32)
    out = jax.block_until_ready(network_forward(x, prep_bf16))
    ref = reference_forward(x, params, jnp.bfloat16)
    assert out.shape == (batch, output_dim)
    assert jnp.allclose(out, ref, atol=2e-2, rtol=2e-2)

    # 2) Float32 compute path (parity option for training loops that need it).
    out_f32 = jax.block_until_ready(network_forward(x, prep_f32))
    ref_f32 = reference_forward(x, params, jnp.float32)
    assert out_f32.shape == (batch, output_dim)
    assert jnp.allclose(out_f32, ref_f32, atol=2e-2, rtol=2e-2)

    # 3) Ragged batch + multi-step parallel grid (200 -> pad 256, TB=64, 4 steps).
    x2 = jax.random.normal(k_x2, (200, input_dim), jnp.float32)
    out2 = jax.block_until_ready(network_forward(x2, prep_bf16, block_batch=64))
    ref2 = reference_forward(x2, params, jnp.bfloat16)
    assert out2.shape == (200, output_dim)
    assert jnp.allclose(out2, ref2, atol=2e-2, rtol=2e-2)

    print("KERNEL_OK")
</pallas_src>

<mosaic_0001>
module attributes {stable_mosaic.version = 11 : i64} {
  func.func @_mlp_kernel(%arg0: i32, %arg1: memref<16x16xf32, #tpu.memory_space<vmem>>, %arg2: memref<16x128xbf16, #tpu.memory_space<vmem>>, %arg3: memref<1x128xf32, #tpu.memory_space<vmem>>, %arg4: memref<128x128xbf16, #tpu.memory_space<vmem>>, %arg5: memref<1x128xf32, #tpu.memory_space<vmem>>, %arg6: memref<128x128xbf16, #tpu.memory_space<vmem>>, %arg7: memref<1x128xf32, #tpu.memory_space<vmem>>, %arg8: memref<16x128xf32, #tpu.memory_space<vmem>>) attributes {dimension_semantics = [#tpu.dimension_semantics<parallel>], iteration_bounds = array<i64: 1>, scalar_prefetch = 0 : i64, scratch_operands = 0 : i64, tpu.core_type = #tpu.core_type<tc>, window_params = [{transform_indices = @transform_0, window_bounds = array<i64: 16, 16>}, {pipeline_mode = #tpu.pipeline_mode<synchronous>, transform_indices = @transform_1, window_bounds = array<i64: 16, 128>}, {pipeline_mode = #tpu.pipeline_mode<synchronous>, transform_indices = @transform_2, window_bounds = array<i64: 1, 128>}, {pipeline_mode = #tpu.pipeline_mode<synchronous>, transform_indices = @transform_3, window_bounds = array<i64: 128, 128>}, {pipeline_mode = #tpu.pipeline_mode<synchronous>, transform_indices = @transform_4, window_bounds = array<i64: 1, 128>}, {pipeline_mode = #tpu.pipeline_mode<synchronous>, transform_indices = @transform_5, window_bounds = array<i64: 128, 128>}, {pipeline_mode = #tpu.pipeline_mode<synchronous>, transform_indices = @transform_6, window_bounds = array<i64: 1, 128>}, {transform_indices = @transform_7, window_bounds = array<i64: 16, 128>}]} {
    %c0 = arith.constant 0 : index
    %c0_0 = arith.constant 0 : index
    %0 = vector.load %arg1[%c0, %c0_0] : memref<16x16xf32, #tpu.memory_space<vmem>>, vector<16x16xf32>
    %1 = arith.truncf %0 : vector<16x16xf32> to vector<16x16xbf16>
    %c0_1 = arith.constant 0 : index
    %c0_2 = arith.constant 0 : index
    %2 = vector.load %arg2[%c0_1, %c0_2] : memref<16x128xbf16, #tpu.memory_space<vmem>>, vector<16x128xbf16>
    %cst = arith.constant dense<0.000000e+00> : vector<16x128xf32>
    %3 = tpu.matmul %1, %2, %cst {dimension_numbers = #tpu.dot_dimension_numbers<[1], [0], [0], [1], [0, 0, 1, 1], [], []>} : vector<16x16xbf16>, vector<16x128xbf16>, vector<16x128xf32> -> vector<16x128xf32>
    %c0_3 = arith.constant 0 : index
    %c0_4 = arith.constant 0 : index
    %4 = vector.load %arg3[%c0_3, %c0_4] : memref<1x128xf32, #tpu.memory_space<vmem>>, vector<1x128xf32>
    %5 = vector.broadcast %4 : vector<1x128xf32> to vector<16x128xf32>
    %6 = arith.addf %3, %5 : vector<16x128xf32>
    %cst_5 = arith.constant 0.000000e+00 : f32
    %7 = vector.broadcast %cst_5 : f32 to vector<16x128xf32>
    %8 = arith.maximumf %6, %7 : vector<16x128xf32>
    %9 = arith.truncf %8 : vector<16x128xf32> to vector<16x128xbf16>
    %c0_6 = arith.constant 0 : index
    %c0_7 = arith.constant 0 : index
    %10 = vector.load %arg4[%c0_6, %c0_7] : memref<128x128xbf16, #tpu.memory_space<vmem>>, vector<128x128xbf16>
    %cst_8 = arith.constant dense<0.000000e+00> : vector<16x128xf32>
    %11 = tpu.matmul %9, %10, %cst_8 {dimension_numbers = #tpu.dot_dimension_numbers<[1], [0], [0], [1], [0, 0, 1, 1], [], []>} : vector<16x128xbf16>, vector<128x128xbf16>, vector<16x128xf32> -> vector<16x128xf32>
    %c0_9 = arith.constant 0 : index
    %c0_10 = arith.constant 0 : index
    %12 = vector.load %arg5[%c0_9, %c0_10] : memref<1x128xf32, #tpu.memory_space<vmem>>, vector<1x128xf32>
    %13 = vector.broadcast %12 : vector<1x128xf32> to vector<16x128xf32>
    %14 = arith.addf %11, %13 : vector<16x128xf32>
    %cst_11 = arith.constant 0.000000e+00 : f32
    %15 = vector.broadcast %cst_11 : f32 to vector<16x128xf32>
    %16 = arith.maximumf %14, %15 : vector<16x128xf32>
    %17 = arith.truncf %16 : vector<16x128xf32> to vector<16x128xbf16>
    %c0_12 = arith.constant 0 : index
    %c0_13 = arith.constant 0 : index
    %18 = vector.load %arg6[%c0_12, %c0_13] : memref<128x128xbf16, #tpu.memory_space<vmem>>, vector<128x128xbf16>
    %cst_14 = arith.constant dense<0.000000e+00> : vector<16x128xf32>
    %19 = tpu.matmul %17, %18, %cst_14 {dimension_numbers = #tpu.dot_dimension_numbers<[1], [0], [0], [1], [0, 0, 1, 1], [], []>} : vector<16x128xbf16>, vector<128x128xbf16>, vector<16x128xf32> -> vector<16x128xf32>
    %c0_15 = arith.constant 0 : index
    %c0_16 = arith.constant 0 : index
    %20 = vector.load %arg7[%c0_15, %c0_16] : memref<1x128xf32, #tpu.memory_space<vmem>>, vector<1x128xf32>
    %21 = vector.broadcast %20 : vector<1x128xf32> to vector<16x128xf32>
    %22 = arith.addf %19, %21 : vector<16x128xf32>
    %c0_17 = arith.constant 0 : index
    %c0_18 = arith.constant 0 : index
    %23 = vector.load %arg8[%c0_17, %c0_18] : memref<16x128xf32, #tpu.memory_space<vmem>>, vector<16x128xf32>
    tpu.vector_store %arg8[%c0_17, %c0_18], %22 {strides = array<i32>} : memref<16x128xf32, #tpu.memory_space<vmem>>, vector<16x128xf32>,
    return
  }
  func.func @transform_0(%arg0: i32) -> (i32, i32) {
    %c0_i32 = arith.constant 0 : i32
    %c0_i32_0 = arith.constant 0 : i32
    return %arg0, %c0_i32 : i32, i32
  }
  func.func @transform_1(%arg0: i32) -> (i32, i32) {
    %c0_i32 = arith.constant 0 : i32
    %c0_i32_0 = arith.constant 0 : i32
    %c0_i32_1 = arith.constant 0 : i32
    return %c0_i32, %c0_i32_0 : i32, i32
  }
  func.func @transform_2(%arg0: i32) -> (i32, i32) {
    %c0_i32 = arith.constant 0 : i32
    %c0_i32_0 = arith.constant 0 : i32
    %c0_i32_1 = arith.constant 0 : i32
    return %c0_i32, %c0_i32_0 : i32, i32
  }
  func.func @transform_3(%arg0: i32) -> (i32, i32) {
    %c0_i32 = arith.constant 0 : i32
    %c0_i32_0 = arith.constant 0 : i32
    %c0_i32_1 = arith.constant 0 : i32
    return %c0_i32, %c0_i32_0 : i32, i32
  }
  func.func @transform_4(%arg0: i32) -> (i32, i32) {
    %c0_i32 = arith.constant 0 : i32
    %c0_i32_0 = arith.constant 0 : i32
    %c0_i32_1 = arith.constant 0 : i32
    return %c0_i32, %c0_i32_0 : i32, i32
  }
  func.func @transform_5(%arg0: i32) -> (i32, i32) {
    %c0_i32 = arith.constant 0 : i32
    %c0_i32_0 = arith.constant 0 : i32
    %c0_i32_1 = arith.constant 0 : i32
    return %c0_i32, %c0_i32_0 : i32, i32
  }
  func.func @transform_6(%arg0: i32) -> (i32, i32) {
    %c0_i32 = arith.constant 0 : i32
    %c0_i32_0 = arith.constant 0 : i32
    %c0_i32_1 = arith.constant 0 : i32
    return %c0_i32, %c0_i32_0 : i32, i32
  }
  func.func @transform_7(%arg0: i32) -> (i32, i32) {
    %c0_i32 = arith.constant 0 : i32
    %c0_i32_0 = arith.constant 0 : i32
    return %arg0, %c0_i32 : i32, i32
  }
}

</mosaic_0001>

<llo_original>
// kernel: tpu_custom_call.1
$region0: #{tpu_custom_call.1}
  #allocation0 [shape = 'u32[]', space=smem, size = 0x4, offset = 0x4, fixed_abs, tag = 'smem constant byte address 0x4 - core index']
  #allocation1 [shape = 'u32[72,128]{1,0:T(1,128)}', space=vmem, size = 0x9000, scoped, tag = 'internal scratch']
  %s0 = inlined_call_operand.hbm [shape: f32[16,16], index: 0, kind: input, shape index: {}]
  %s1 = inlined_call_operand.hbm [shape: bf16[16,128], index: 1, kind: input, shape index: {}]
  %s2 = inlined_call_operand.vmem [shape: f32[1,128], index: 2, kind: input, shape index: {}]
  %s3 = inlined_call_operand.hbm [shape: bf16[128,128], index: 3, kind: input, shape index: {}]
  %s4 = inlined_call_operand.vmem [shape: f32[1,128], index: 4, kind: input, shape index: {}]
  %s5 = inlined_call_operand.hbm [shape: bf16[128,128], index: 5, kind: input, shape index: {}]
  %s6 = inlined_call_operand.vmem [shape: f32[1,128], index: 6, kind: input, shape index: {}]
  %s7 = inlined_call_operand.hbm [shape: f32[16,128], index: 7, kind: output, shape index: {}]
  %s8 = sld [smem:[#allocation0]]
  $region54: #{tpu_custom_call.1} parent=0
    _
  %s10 = ssub.s32 1, %s8
  %s11 = scalar_select 0, %s10, %s8
  $region1: #{tpu_custom_call.1} parent=0
    #allocation2 [shape = 'u8[8192]{0}', space=vmem, size = 0x2000, scoped, tag = 'input window, operand 0, single buffered']
    #allocation3 [shape = 's32[1]{0}', space=sflag, size = 0x4, scoped, tag = 'scoped memory for tpu_custom_call.1']
    #allocation4 [shape = 's32[1]{0}', space=sflag, size = 0x4, scoped, tag = 'scoped memory for tpu_custom_call.1']
    #allocation5 [shape = 'u8[4096]{0}', space=vmem, size = 0x1000, scoped, tag = 'input window, operand 1, single buffered']
    #allocation6 [shape = 's32[1]{0}', space=sflag, size = 0x4, scoped, tag = 'scoped memory for tpu_custom_call.1']
    #allocation7 [shape = 'u8[32768]{0}', space=vmem, size = 0x8000, scoped, tag = 'input window, operand 3, single buffered']
    #allocation8 [shape = 'u8[32768]{0}', space=vmem, size = 0x8000, scoped, tag = 'input window, operand 5, single buffered']
    #allocation9 [shape = 's32[1]{0}', space=sflag, size = 0x4, scoped, tag = 'scoped memory for tpu_custom_call.1']
    #allocation10 [shape = 'u8[8192]{0}', space=vmem, size = 0x2000, scoped, tag = 'output window, operand 0, single buffered']
    %12 = vsyncpa [#allocation3], 0
    %13 = vsyncpa [#allocation6], 0
    %14 = vsyncpa [#allocation9], 0
    %15 = vsyncpa [#allocation4], 0
    // Predicated region
    $region2: #{tpu_custom_call.1} parent=1 // pred_check
      _
    $region3: #{tpu_custom_call.1} parent=1 // pred_check_branch
      %17 = sbr.rel (0) target = $region5
    $region4: #{tpu_custom_call.1} parent=1 // pred_region
      %19 = vsyncadd [#allocation3], 0
      %s20 = sshll.u32 %s0, 4
      %s21 = int_to_ptr.hbm [resolvable:$true] %s20
      %s22 = sshll.u32 [#allocation2], 4
      %s23 = int_to_ptr.vmem [resolvable:$true] %s22
      %28 = dma.hbm_to_vmem [thread:$0]  %s21, 256, %s23, [#allocation3], 128, 128, 8
    $region5: #{tpu_custom_call.1} parent=1 // pred_fallthru
      _
    // Predicated region
    $region6: #{tpu_custom_call.1} parent=1 // pred_check
      _
    $region7: #{tpu_custom_call.1} parent=1 // pred_check_branch
      %30 = sbr.rel (0) target = $region9
    $region8: #{tpu_custom_call.1} parent=1 // pred_region
      %32 = vsyncadd [#allocation6], 0
      %s33 = sshll.u32 %s1, 4
      %s34 = int_to_ptr.hbm [resolvable:$true] %s33
      %s35 = sshll.u32 [#allocation5], 4
      %s36 = int_to_ptr.vmem [resolvable:$true] %s35
      %41 = dma.hbm_to_vmem [thread:$0]  %s34, 128, %s36, [#allocation6], 64, 64, 4
    $region9: #{tpu_custom_call.1} parent=1 // pred_fallthru
      _
    // Predicated region
    $region10: #{tpu_custom_call.1} parent=1 // pred_check
      _
    $region11: #{tpu_custom_call.1} parent=1 // pred_check_branch
      %43 = sbr.rel (0) target = $region13
    $region12: #{tpu_custom_call.1} parent=1 // pred_region
      _
    $region13: #{tpu_custom_call.1} parent=1 // pred_fallthru
      _
    // Predicated region
    $region14: #{tpu_custom_call.1} parent=1 // pred_check
      _
    $region15: #{tpu_custom_call.1} parent=1 // pred_check_branch
      %45 = sbr.rel (0) target = $region17
    $region16: #{tpu_custom_call.1} parent=1 // pred_region
      %47 = vsyncadd [#allocation6], 0
      %s48 = sshll.u32 %s3, 4
      %s49 = int_to_ptr.hbm [resolvable:$true] %s48
      %s50 = sshll.u32 [#allocation7], 4
      %s51 = int_to_ptr.vmem [resolvable:$true] %s50
      %56 = dma.hbm_to_vmem [thread:$0]  %s49, 1024, %s51, [#allocation6], 64, 64, 4
    $region17: #{tpu_custom_call.1} parent=1 // pred_fallthru
      _
    // Predicated region
    $region18: #{tpu_custom_call.1} parent=1 // pred_check
      _
    $region19: #{tpu_custom_call.1} parent=1 // pred_check_branch
      %58 = sbr.rel (0) target = $region21
    $region20: #{tpu_custom_call.1} parent=1 // pred_region
      _
    $region21: #{tpu_custom_call.1} parent=1 // pred_fallthru
      _
    // Predicated region
    $region22: #{tpu_custom_call.1} parent=1 // pred_check
      _
    $region23: #{tpu_custom_call.1} parent=1 // pred_check_branch
      %60 = sbr.rel (0) target = $region25
    $region24: #{tpu_custom_call.1} parent=1 // pred_region
      %62 = vsyncadd [#allocation9], 0
      %s63 = sshll.u32 %s5, 4
      %s64 = int_to_ptr.hbm [resolvable:$true] %s63
      %s65 = sshll.u32 [#allocation8], 4
      %s66 = int_to_ptr.vmem [resolvable:$true] %s65
      %71 = dma.hbm_to_vmem [thread:$0]  %s64, 1024, %s66, [#allocation9], 64, 64, 4
    $region25: #{tpu_custom_call.1} parent=1 // pred_fallthru
      _
    // Predicated region
    $region26: #{tpu_custom_call.1} parent=1 // pred_check
      _
    $region27: #{tpu_custom_call.1} parent=1 // pred_check_branch
      %73 = sbr.rel (0) target = $region29
    $region28: #{tpu_custom_call.1} parent=1 // pred_region
      _
    $region29: #{tpu_custom_call.1} parent=1 // pred_fallthru
      _
    // Predicated region
    $region30: #{tpu_custom_call.1} parent=1 // pred_check
      _
    $region31: #{tpu_custom_call.1} parent=1 // pred_check_branch
      %75 = sbr.rel (0) target = $region33
    $region32: #{tpu_custom_call.1} parent=1 // pred_region
      %77 = dma.done [#allocation3], 256
    $region33: #{tpu_custom_call.1} parent=1 // pred_fallthru
      _
    // Predicated region
    $region34: #{tpu_custom_call.1} parent=1 // pred_check
      _
    $region35: #{tpu_custom_call.1} parent=1 // pred_check_branch
      %79 = sbr.rel (0) target = $region37
    $region36: #{tpu_custom_call.1} parent=1 // pred_region
      %81 = dma.done [#allocation6], 128
    $region37: #{tpu_custom_call.1} parent=1 // pred_fallthru
      _
    // Predicated region
    $region38: #{tpu_custom_call.1} parent=1 // pred_check
      _
    $region39: #{tpu_custom_call.1} parent=1 // pred_check_branch
      %83 = sbr.rel (0) target = $region41
    $region40: #{tpu_custom_call.1} parent=1 // pred_region
      %85 = dma.done [#allocation6], 1024
    $region41: #{tpu_custom_call.1} parent=1 // pred_fallthru
      _
    // Predicated region
    $region42: #{tpu_custom_call.1} parent=1 // pred_check
      _
    $region43: #{tpu_custom_call.1} parent=1 // pred_check_branch
      %87 = sbr.rel (0) target = $region45
    $region44: #{tpu_custom_call.1} parent=1 // pred_region
      %89 = dma.done [#allocation9], 1024
    $region45: #{tpu_custom_call.1} parent=1 // pred_fallthru
      _
    %v91 = vld [vmem:[#allocation2] sm:$0xff]
    %v92 = vld [vmem:[#allocation2 + $0x8] sm:$0xff]
    %v93 = vpack.c.bf16 %v92, %v91
    %v94 = vld [vmem:[#allocation5] sm:$0xf]
    %v95 = vld [vmem:[#allocation5 + $0x4] sm:$0xf]
    %v96 = vld [vmem:[%s2] sm:$0x1]
    %v98 = vperm.slane %v96, 0
    %v102 = vunpack.c.l.b16 %v94
    %v103 = vunpack.c.l.b16 %v95
    %v104 = vpack.c.b16 %v103, %v102
    %vm106 = vcmask 130048
    %v108 = vsel %vm106, %v93, 0
    %110 = vmatpush.bf16.msra.mxu0 0
    %111 = vmatpush.bf16.msra.mxu0 0
    %112 = vmatpush.bf16.msra.mxu0 0
    %113 = vmatpush.bf16.msra.mxu0 0
    %114 = vmatpush.bf16.msra.mxu0 0
    %115 = vmatpush.bf16.msra.mxu0 0
    %116 = vmatpush.bf16.msra.mxu0 0
    %117 = vmatpush.bf16.msra.mxu0 %v104
    %118 = vmatmul.bf16.gmra.mxu0 %v108
    %v119 = vpop.f32.mrf.mxu0
    %v120 = vadd.f32 %v98, %v119
    %v121 = vpop.f32.mrf.mxu0
    %v122 = vadd.f32 %v98, %v121
    %123 = vdwg.mxu0
    %v124 = vmax.f32 %v120, 0.0
    %v125 = vmax.f32 %v122, 0.0
    %v126 = vpack.c.bf16 %v125, %v124
    %v127 = vld [vmem:[#allocation7] sm:$0xf]
    %v128 = vld [vmem:[#allocation7 + $0x4] sm:$0xf]
    %v129 = vld [vmem:[#allocation7 + $0x8] sm:$0xf]
    %v130 = vld [vmem:[#allocation7 + $0xc] sm:$0xf]
    %v131 = vld [vmem:[#allocation7 + $0x10] sm:$0xf]
    %v132 = vld [vmem:[#allocation7 + $0x14] sm:$0xf]
    %v133 = vld [vmem:[#allocation7 + $0x18] sm:$0xf]
    %v134 = vld [vmem:[#allocation7 + $0x1c] sm:$0xf]
    %v135 = vld [vmem:[#allocation7 + $0x20] sm:$0xf]
    %v136 = vld [vmem:[#allocation7 + $0x24] sm:$0xf]
    %v137 = vld [vmem:[#allocation7 + $0x28] sm:$0xf]
    %v138 = vld [vmem:[#allocation7 + $0x2c] sm:$0xf]
    %v139 = vld [vmem:[#allocation7 + $0x30] sm:$0xf]
    %v140 = vld [vmem:[#allocation7 + $0x34] sm:$0xf]
    %v141 = vld [vmem:[#allocation7 + $0x38] sm:$0xf]
    %v142 = vld [vmem:[#allocation7 + $0x3c] sm:$0xf]
    %v143 = vld [vmem:[%s4] sm:$0x1]
    %v145 = vperm.slane %v143, 0
    %v163 = vunpack.c.l.b16 %v127
    %v164 = vunpack.c.l.b16 %v128
    %v165 = vunpack.c.l.b16 %v129
    %v166 = vunpack.c.l.b16 %v130
    %v167 = vunpack.c.l.b16 %v131
    %v168 = vunpack.c.l.b16 %v132
    %v169 = vunpack.c.l.b16 %v133
    %v170 = vunpack.c.l.b16 %v134
    %v171 = vunpack.c.l.b16 %v135
    %v172 = vunpack.c.l.b16 %v136
    %v173 = vunpack.c.l.b16 %v137
    %v174 = vunpack.c.l.b16 %v138
    %v175 = vunpack.c.l.b16 %v139
    %v176 = vunpack.c.l.b16 %v140
    %v177 = vunpack.c.l.b16 %v141
    %v178 = vunpack.c.l.b16 %v142
    %v179 = vpack.c.b16 %v164, %v163
    %v180 = vpack.c.b16 %v166, %v165
    %v181 = vpack.c.b16 %v168, %v167
    %v182 = vpack.c.b16 %v170, %v169
    %v183 = vpack.c.b16 %v172, %v171
    %v184 = vpack.c.b16 %v174, %v173
    %v185 = vpack.c.b16 %v176, %v175
    %v186 = vpack.c.b16 %v178, %v177
    %195 = vmatpush.bf16.msra.mxu0 %v186
    %196 = vmatpush.bf16.msra.mxu0 %v185
    %197 = vmatpush.bf16.msra.mxu0 %v184
    %198 = vmatpush.bf16.msra.mxu0 %v183
    %199 = vmatpush.bf16.msra.mxu0 %v182
    %200 = vmatpush.bf16.msra.mxu0 %v181
    %201 = vmatpush.bf16.msra.mxu0 %v180
    %202 = vmatpush.bf16.msra.mxu0 %v179
    %203 = vmatmul.bf16.gmra.mxu0 %v126
    %v204 = vpop.f32.mrf.mxu0
    %v205 = vadd.f32 %v145, %v204
    %v206 = vpop.f32.mrf.mxu0
    %v207 = vadd.f32 %v145, %v206
    %208 = vdwg.mxu0
    %v209 = vmax.f32 %v205, 0.0
    %v210 = vmax.f32 %v207, 0.0
    %v211 = vpack.c.bf16 %v210, %v209
    %v212 = vld [vmem:[#allocation8] sm:$0xf]
    %v213 = vld [vmem:[#allocation8 + $0x4] sm:$0xf]
    %v214 = vld [vmem:[#allocation8 + $0x8] sm:$0xf]
    %v215 = vld [vmem:[#allocation8 + $0xc] sm:$0xf]
    %v216 = vld [vmem:[#allocation8 + $0x10] sm:$0xf]
    %v217 = vld [vmem:[#allocation8 + $0x14] sm:$0xf]
    %v218 = vld [vmem:[#allocation8 + $0x18] sm:$0xf]
    %v219 = vld [vmem:[#allocation8 + $0x1c] sm:$0xf]
    %v220 = vld [vmem:[#allocation8 + $0x20] sm:$0xf]
    %v221 = vld [vmem:[#allocation8 + $0x24] sm:$0xf]
    %v222 = vld [vmem:[#allocation8 + $0x28] sm:$0xf]
    %v223 = vld [vmem:[#allocation8 + $0x2c] sm:$0xf]
    %v224 = vld [vmem:[#allocation8 + $0x30] sm:$0xf]
    %v225 = vld [vmem:[#allocation8 + $0x34] sm:$0xf]
    %v226 = vld [vmem:[#allocation8 + $0x38] sm:$0xf]
    %v227 = vld [vmem:[#allocation8 + $0x3c] sm:$0xf]
    %v228 = vld [vmem:[%s6] sm:$0x1]
    %v230 = vperm.slane %v228, 0
    %v248 = vunpack.c.l.b16 %v212
    %v249 = vunpack.c.l.b16 %v213
    %v250 = vunpack.c.l.b16 %v214
    %v251 = vunpack.c.l.b16 %v215
    %v252 = vunpack.c.l.b16 %v216
    %v253 = vunpack.c.l.b16 %v217
    %v254 = vunpack.c.l.b16 %v218
    %v255 = vunpack.c.l.b16 %v219
    %v256 = vunpack.c.l.b16 %v220
    %v257 = vunpack.c.l.b16 %v221
    %v258 = vunpack.c.l.b16 %v222
    %v259 = vunpack.c.l.b16 %v223
    %v260 = vunpack.c.l.b16 %v224
    %v261 = vunpack.c.l.b16 %v225
    %v262 = vunpack.c.l.b16 %v226
    %v263 = vunpack.c.l.b16 %v227
    %v264 = vpack.c.b16 %v249, %v248
    %v265 = vpack.c.b16 %v251, %v250
    %v266 = vpack.c.b16 %v253, %v252
    %v267 = vpack.c.b16 %v255, %v254
    %v268 = vpack.c.b16 %v257, %v256
    %v269 = vpack.c.b16 %v259, %v258
    %v270 = vpack.c.b16 %v261, %v260
    %v271 = vpack.c.b16 %v263, %v262
    %280 = vmatpush.bf16.msra.mxu0 %v271
    %281 = vmatpush.bf16.msra.mxu0 %v270
    %282 = vmatpush.bf16.msra.mxu0 %v269
    %283 = vmatpush.bf16.msra.mxu0 %v268
    %284 = vmatpush.bf16.msra.mxu0 %v267
    %285 = vmatpush.bf16.msra.mxu0 %v266
    %286 = vmatpush.bf16.msra.mxu0 %v265
    %287 = vmatpush.bf16.msra.mxu0 %v264
    %288 = vmatmul.bf16.gmra.mxu0 %v211
    %v289 = vpop.f32.mrf.mxu0
    %v290 = vadd.f32 %v230, %v289
    %v291 = vpop.f32.mrf.mxu0
    %v292 = vadd.f32 %v230, %v291
    %293 = vdwg.mxu0
    %294 = vst [vmem:[#allocation10] sm:$0xff] %v290
    %295 = vst [vmem:[#allocation10 + $0x8] sm:$0xff] %v292
    // Predicated region
    $region46: #{tpu_custom_call.1} parent=1 // pred_check
      _
    $region47: #{tpu_custom_call.1} parent=1 // pred_check_branch
      %297 = sbr.rel (0) target = $region49
    $region48: #{tpu_custom_call.1} parent=1 // pred_region
      %299 = vsyncadd [#allocation4], 0
      %s300 = sshll.u32 [#allocation10], 4
      %s301 = int_to_ptr.vmem [resolvable:$true] %s300
      %s302 = sshll.u32 %s7, 4
      %s303 = int_to_ptr.hbm [resolvable:$true] %s302
      %308 = dma.vmem_to_hbm [thread:$0]  %s301, 256, %s303, [#allocation4], 128, 128, 8
    $region49: #{tpu_custom_call.1} parent=1 // pred_fallthru
      _
    // Predicated region
    $region50: #{tpu_custom_call.1} parent=1 // pred_check
      _
    $region51: #{tpu_custom_call.1} parent=1 // pred_check_branch
      %310 = sbr.rel (0) target = $region53
    $region52: #{tpu_custom_call.1} parent=1 // pred_region
      %312 = dma.done [#allocation4], 256
    $region53: #{tpu_custom_call.1} parent=1 // pred_fallthru
      _
    %313 = vsyncpa [#allocation3], 1
    %314 = vsyncpa [#allocation6], 1
    %315 = vsyncpa [#allocation9], 1
    %316 = vsyncpa [#allocation4], 1

</llo_original>
